<compile_context>
chip_gen: v7x
topology: tpu7x:2x2x1
jax: 0.10.0
libtpu: 0.0.40
codegen_flags: <defaults>
</compile_context>

<pallas_src>
import jax
import jax.numpy as jnp
from jax.experimental import pallas as pl
from jax.experimental.pallas import tpu as pltpu


# --------------------------------------------------------------------------
# per-generation budgets
# --------------------------------------------------------------------------
def _chip_config():
    """Returns (scoped VMEM limit bytes, TensorCores per chip)."""
    kind = ""
    try:
        kind = jax.devices()[0].device_kind.lower()
    except Exception:
        pass
    if "v7" in kind or "tpu7" in kind:
        vmem_limit, n_cores = 32 * 1024 * 1024, 2      # v7x: 64 MiB physical / TC
    else:
        vmem_limit, n_cores = 96 * 1024 * 1024, 1      # v5e/v6e: 128 MiB physical
    try:  # refine from the hardware query when available
        phys = int(pltpu.get_tpu_info().vmem_capacity_bytes)
        vmem_limit = min(vmem_limit, (phys * 3) // 4)  # leave headroom
    except Exception:
        pass
    return vmem_limit, n_cores


# --------------------------------------------------------------------------
# main path: whole images per grid step (1 read + 1 write of x)
# --------------------------------------------------------------------------
def _se_kernel(x_ref, w1t_ref, w2t_ref, o_ref):
    # x_ref: (Bt, C, HW) -- lane axis = HW
    x = x_ref[...]
    # squeeze: f32-accumulated global average pool over the spatial axis.
    y = jnp.mean(x, axis=-1, dtype=jnp.float32)                           # (Bt, C)
    # excitation: Linear -> ReLU -> Linear -> Sigmoid (tiny MXU matmuls, M=Bt)
    h = jnp.maximum(
        jnp.dot(y, w1t_ref[...], preferred_element_type=jnp.float32), 0.0)
    s = jax.nn.sigmoid(
        jnp.dot(h, w2t_ref[...], preferred_element_type=jnp.float32))     # (Bt, C)
    # scale: single store; gating multiply kept in the input dtype so the block
    # VMEM footprint stays at the input dtype.
    # TODO(synk): under bf16 autocast PyTorch would keep s in f32 for the
    # multiply; decide/benchmark that variant for low-precision inputs.
    o_ref[...] = x * s.astype(x.dtype)[:, :, None]


def _se_single_pass(x3, w1t, w2t, *, target_block_bytes, vmem_limit, n_cores):
    B, C, HW = x3.shape
    C_red = w1t.shape[1]
    itemsize = jnp.dtype(x3.dtype).itemsize
    bytes_per_image = C * HW * itemsize

    # Largest Bt dividing B that fits the budget while keeping >= 2 grid steps
    # per TensorCore (so both v7x cores get pipelined work).
    min_steps = min(B, 2 * n_cores)
    Bt = 1
    for d in range(B, 0, -1):
        if B % d:
            continue
        if d * bytes_per_image > target_block_bytes:
            continue
        if (B // d) < min_steps:
            continue
        Bt = d
        break
    block = (Bt, C, HW)

    cost = pl.CostEstimate(
        flops=int(B * (2 * C * HW + 4 * C * C_red)),
        transcendentals=int(B * C),
        bytes_accessed=int(2 * B * C * HW * itemsize
                           + 2 * C * C_red * jnp.dtype(w1t.dtype).itemsize),
    )

    def call(single_buffer_weights):
        wkw = ({"pipeline_mode": pl.Buffered(1)}
               if single_buffer_weights else {})
        return pl.pallas_call(
            _se_kernel,
            out_shape=jax.ShapeDtypeStruct((B, C, HW), x3.dtype),
            grid_spec=pltpu.PrefetchScalarGridSpec(
                num_scalar_prefetch=0,
                grid=(B // Bt,),
                in_specs=[
                    pl.BlockSpec(block, lambda b: (b, 0, 0)),
                    pl.BlockSpec((C, C_red), lambda b: (0, 0), **wkw),  # resident
                    pl.BlockSpec((C_red, C), lambda b: (0, 0), **wkw),  # resident
                ],
                out_specs=pl.BlockSpec(block, lambda b: (b, 0, 0)),
            ),
            compiler_params=pltpu.CompilerParams(
                dimension_semantics=("parallel",),
                vmem_limit_bytes=vmem_limit,
            ),
            cost_estimate=cost,
        )(x3, w1t, w2t)

    try:
        return call(True)
    except Exception:
        # pl.Buffered(1) not supported by this jax/libtpu combo -> default buffering
        return call(False)


# --------------------------------------------------------------------------
# fallback path: HW-tiled two-pass (used when one image exceeds the budget)
# --------------------------------------------------------------------------
def _se_two_pass(x3, w1t, w2t, *, target_block_bytes, vmem_limit):
    B, C, HW = x3.shape
    C_red = w1t.shape[1]
    itemsize = jnp.dtype(x3.dtype).itemsize

    # spatial tile: 128-lane-aligned, sized to the block budget
    # TODO(synk): add channel tiling for the (rare) case where C alone makes a
    # single 128-lane column exceed the budget.
    hwt = max(128, (target_block_bytes // max(1, C * itemsize)) // 128 * 128)
    if hwt >= HW:
        hwt = HW
    n_hw = pl.cdiv(HW, hwt)
    inv_hw = 1.0 / float(HW)

    # ---- pass 1: pooled mean (f32).  Output is padded to 8 sublanes so the
    # ---- (1, 8, C) block satisfies the (8, 128)/full-dim tiling rule.
    def pool_kernel(x_ref, y_ref):
        h = pl.program_id(1)

        @pl.when(h == 0)
        def _():
            y_ref[...] = jnp.zeros_like(y_ref)

        x = x_ref[...]                                              # (1, C, hwt)
        pos = h * hwt + jax.lax.broadcasted_iota(jnp.int32, x.shape, 2)
        xm = jnp.where(pos < HW, x.astype(jnp.float32), 0.0)        # mask tail
        y_ref[...] += jnp.sum(xm, axis=-1)[:, None, :]              # bcast sublanes

        @pl.when(h == pl.num_programs(1) - 1)
        def _():
            y_ref[...] *= inv_hw

    pool_cost = pl.CostEstimate(
        flops=int(B * C * HW),
        transcendentals=0,
        bytes_accessed=int(B * C * HW * itemsize + B * 8 * C * 4),
    )
    y_pad = pl.pallas_call(
        pool_kernel,
        out_shape=jax.ShapeDtypeStruct((B, 8, C), jnp.float32),
        grid_spec=pltpu.PrefetchScalarGridSpec(
            num_scalar_prefetch=0,
            grid=(B, n_hw),
            in_specs=[pl.BlockSpec((1, C, hwt), lambda b, h: (b, 0, h))],
            out_specs=pl.BlockSpec((1, 8, C), lambda b, h: (b, 0, 0)),
        ),
        compiler_params=pltpu.CompilerParams(
            dimension_semantics=("parallel", "arbitrary"),
            vmem_limit_bytes=vmem_limit,
        ),
        cost_estimate=pool_cost,
    )(x3)

    # ---- pass 2: excitation (tiny FC recomputed per tile, hidden under DMA)
    # ---- + scale, streaming x once more.
    def scale_kernel(y_ref, w1t_ref, w2t_ref, x_ref, o_ref):
        y = y_ref[...][:, 0, :]                                     # (1, C) f32 mean
        h = jnp.maximum(
            jnp.dot(y, w1t_ref[...], preferred_element_type=jnp.float32), 0.0)
        s = jax.nn.sigmoid(
            jnp.dot(h, w2t_ref[...], preferred_element_type=jnp.float32))   # (1, C)
        x = x_ref[...]                                              # (1, C, hwt)
        o_ref[...] = x * s.astype(x.dtype)[:, :, None]

    scale_cost = pl.CostEstimate(
        flops=int(B * (C * HW + n_hw * 4 * C * C_red)),
        transcendentals=int(B * n_hw * C),
        bytes_accessed=int(2 * B * C * HW * itemsize
                           + 2 * C * C_red * jnp.dtype(w1t.dtype).itemsize),
    )

    def call(single_buffer_weights):
        wkw = ({"pipeline_mode": pl.Buffered(1)}
               if single_buffer_weights else {})
        return pl.pallas_call(
            scale_kernel,
            out_shape=jax.ShapeDtypeStruct((B, C, HW), x3.dtype),
            grid_spec=pltpu.PrefetchScalarGridSpec(
                num_scalar_prefetch=0,
                grid=(B, n_hw),
                in_specs=[
                    pl.BlockSpec((1, 8, C), lambda b, h: (b, 0, 0)),
                    pl.BlockSpec((C, C_red), lambda b, h: (0, 0), **wkw),
                    pl.BlockSpec((C_red, C), lambda b, h: (0, 0), **wkw),
                    pl.BlockSpec((1, C, hwt), lambda b, h: (b, 0, h)),
                ],
                out_specs=pl.BlockSpec((1, C, hwt), lambda b, h: (b, 0, h)),
            ),
            compiler_params=pltpu.CompilerParams(
                dimension_semantics=("parallel", "parallel"),
                vmem_limit_bytes=vmem_limit,
            ),
            cost_estimate=scale_cost,
        )(y_pad, w1t, w2t, x3)

    try:
        return call(True)
    except Exception:
        return call(False)


# --------------------------------------------------------------------------
# public wrapper
# --------------------------------------------------------------------------
def se_layer_v1(x, w1, w2, *, target_block_bytes=None):
    """x: (B, C, H, W) NCHW.
    w1: (C//r, C)  == fc[0].weight (bias-free nn.Linear)
    w2: (C, C//r)  == fc[2].weight
    """
    B, C, H, W = x.shape
    HW = H * W
    w1t = jnp.asarray(w1).T            # (C, C_red)
    w2t = jnp.asarray(w2).T            # (C_red, C)

    vmem_limit, n_cores = _chip_config()
    if target_block_bytes is None:
        # double-buffered in + out ~= 4x block, plus weight/accumulator slack
        target_block_bytes = vmem_limit // 5

    itemsize = jnp.dtype(x.dtype).itemsize
    x3 = x.reshape(B, C, HW)           # lane axis = HW, no physical transpose

    if C * HW * itemsize <= target_block_bytes:
        out3 = _se_single_pass(
            x3, w1t, w2t,
            target_block_bytes=target_block_bytes,
            vmem_limit=vmem_limit, n_cores=n_cores)
    else:
        out3 = _se_two_pass(
            x3, w1t, w2t,
            target_block_bytes=target_block_bytes,
            vmem_limit=vmem_limit)
    return out3.reshape(B, C, H, W)


def _reference(x, w1, w2):
    # pure-JAX reference mirroring the PyTorch forward
    y = jnp.mean(x.astype(jnp.float32), axis=(2, 3))            # (B, C)
    h = jnp.maximum(y @ w1.T, 0.0)                              # (B, C_red)
    s = jax.nn.sigmoid(h @ w2.T)                                # (B, C)
    return (x.astype(jnp.float32) * s[:, :, None, None]).astype(x.dtype)


if __name__ == "__main__":
    B, C, H, W = 2, 32, 16, 16
    reduction = 16
    C_red = C // reduction

    key = jax.random.PRNGKey(0)
    kx, k1, k2, kx2 = jax.random.split(key, 4)
    x = jax.random.normal(kx, (B, C, H, W), dtype=jnp.float32)
    w1 = jax.random.normal(k1, (C_red, C), dtype=jnp.float32) * 0.1   # fc[0].weight
    w2 = jax.random.normal(k2, (C, C_red), dtype=jnp.float32) * 0.1   # fc[2].weight

    # main (single-pass, batch-blocked) path
    out = jax.block_until_ready(se_layer_v1(x, w1, w2))
    ref = _reference(x, w1, w2)
    assert out.shape == ref.shape, "shape mismatch vs reference"
    assert jnp.allclose(out, ref, atol=1e-5, rtol=1e-5), "main path mismatch"

    # HW-tiled two-pass fallback (forced via a tiny block budget; HW=144 also
    # exercises the non-128-multiple spatial tail masking)
    x2 = jax.random.normal(kx2, (B, C, 12, 12), dtype=jnp.float32)
    out2 = jax.block_until_ready(
        se_layer_v1(x2, w1, w2, target_block_bytes=8 * 1024))
    ref2 = _reference(x2, w1, w2)
    assert out2.shape == ref2.shape, "shape mismatch vs reference (two-pass)"
    assert jnp.allclose(out2, ref2, atol=1e-5, rtol=1e-5), "two-pass path mismatch"

    print("KERNEL_OK")
</pallas_src>

<mosaic_0001>
module attributes {stable_mosaic.version = 11 : i64} {
  func.func @_se_kernel(%arg0: i32, %arg1: memref<1x32x256xf32, #tpu.memory_space<vmem>>, %arg2: memref<32x2xf32, #tpu.memory_space<vmem>>, %arg3: memref<2x32xf32, #tpu.memory_space<vmem>>, %arg4: memref<1x32x256xf32, #tpu.memory_space<vmem>>) attributes {dimension_semantics = [#tpu.dimension_semantics<parallel>], iteration_bounds = array<i64: 2>, scalar_prefetch = 0 : i64, scratch_operands = 0 : i64, tpu.core_type = #tpu.core_type<tc>, window_params = [{transform_indices = @transform_0, window_bounds = array<i64: 1, 32, 256>}, {pipeline_mode = #tpu.pipeline_mode<synchronous>, transform_indices = @transform_1, window_bounds = array<i64: 32, 2>}, {pipeline_mode = #tpu.pipeline_mode<synchronous>, transform_indices = @transform_2, window_bounds = array<i64: 2, 32>}, {transform_indices = @transform_3, window_bounds = array<i64: 1, 32, 256>}]} {
    %c0 = arith.constant 0 : index
    %c0_0 = arith.constant 0 : index
    %c0_1 = arith.constant 0 : index
    %0 = vector.load %arg1[%c0, %c0_0, %c0_1] : memref<1x32x256xf32, #tpu.memory_space<vmem>>, vector<1x32x256xf32>
    %cst = arith.constant dense<0.000000e+00> : vector<1x32xf32>
    %1 = vector.multi_reduction <add>, %0, %cst [2] : vector<1x32x256xf32> to vector<1x32xf32>
    %cst_2 = arith.constant 2.560000e+02 : f32
    %2 = vector.broadcast %cst_2 : f32 to vector<1x32xf32>
    %3 = arith.divf %1, %2 : vector<1x32xf32>
    %c0_3 = arith.constant 0 : index
    %c0_4 = arith.constant 0 : index
    %4 = vector.load %arg2[%c0_3, %c0_4] : memref<32x2xf32, #tpu.memory_space<vmem>>, vector<32x2xf32>
    %cst_5 = arith.constant dense<0.000000e+00> : vector<1x2xf32>
    %5 = tpu.matmul %3, %4, %cst_5 {dimension_numbers = #tpu.dot_dimension_numbers<[1], [0], [0], [1], [0, 0, 1, 1], [], []>} : vector<1x32xf32>, vector<32x2xf32>, vector<1x2xf32> -> vector<1x2xf32>
    %cst_6 = arith.constant 0.000000e+00 : f32
    %6 = vector.broadcast %cst_6 : f32 to vector<1x2xf32>
    %7 = arith.maximumf %5, %6 : vector<1x2xf32>
    %c0_7 = arith.constant 0 : index
    %c0_8 = arith.constant 0 : index
    %8 = vector.load %arg3[%c0_7, %c0_8] : memref<2x32xf32, #tpu.memory_space<vmem>>, vector<2x32xf32>
    %cst_9 = arith.constant dense<0.000000e+00> : vector<1x32xf32>
    %9 = tpu.matmul %7, %8, %cst_9 {dimension_numbers = #tpu.dot_dimension_numbers<[1], [0], [0], [1], [0, 0, 1, 1], [], []>} : vector<1x2xf32>, vector<2x32xf32>, vector<1x32xf32> -> vector<1x32xf32>
    %10 = arith.negf %9 : vector<1x32xf32>
    %11 = math.exp %10 : vector<1x32xf32>
    %cst_10 = arith.constant 1.000000e+00 : f32
    %12 = vector.broadcast %cst_10 : f32 to vector<1x32xf32>
    %13 = arith.addf %12, %11 : vector<1x32xf32>
    %14 = arith.divf %12, %13 : vector<1x32xf32>
    %15 = vector.shape_cast %14 : vector<1x32xf32> to vector<1x32x1xf32>
    %16 = vector.broadcast %15 : vector<1x32x1xf32> to vector<1x32x256xf32>
    %17 = arith.mulf %0, %16 : vector<1x32x256xf32>
    %c0_11 = arith.constant 0 : index
    %c0_12 = arith.constant 0 : index
    %c0_13 = arith.constant 0 : index
    %18 = vector.load %arg4[%c0_11, %c0_12, %c0_13] : memref<1x32x256xf32, #tpu.memory_space<vmem>>, vector<1x32x256xf32>
    tpu.vector_store %arg4[%c0_11, %c0_12, %c0_13], %17 {strides = array<i32>} : memref<1x32x256xf32, #tpu.memory_space<vmem>>, vector<1x32x256xf32>,
    return
  }
  func.func @transform_0(%arg0: i32) -> (i32, i32, i32) {
    %c0_i32 = arith.constant 0 : i32
    %c0_i32_0 = arith.constant 0 : i32
    %c0_i32_1 = arith.constant 0 : i32
    return %arg0, %c0_i32, %c0_i32_0 : i32, i32, i32
  }
  func.func @transform_1(%arg0: i32) -> (i32, i32) {
    %c0_i32 = arith.constant 0 : i32
    %c0_i32_0 = arith.constant 0 : i32
    %c0_i32_1 = arith.constant 0 : i32
    return %c0_i32, %c0_i32_0 : i32, i32
  }
  func.func @transform_2(%arg0: i32) -> (i32, i32) {
    %c0_i32 = arith.constant 0 : i32
    %c0_i32_0 = arith.constant 0 : i32
    %c0_i32_1 = arith.constant 0 : i32
    return %c0_i32, %c0_i32_0 : i32, i32
  }
  func.func @transform_3(%arg0: i32) -> (i32, i32, i32) {
    %c0_i32 = arith.constant 0 : i32
    %c0_i32_0 = arith.constant 0 : i32
    %c0_i32_1 = arith.constant 0 : i32
    return %arg0, %c0_i32, %c0_i32_0 : i32, i32, i32
  }
}

module attributes {stable_mosaic.version = 11 : i64} {
  func.func @_se_kernel(%arg0: i32, %arg1: memref<1x32x256xf32, #tpu.memory_space<vmem>>, %arg2: memref<32x2xf32, #tpu.memory_space<vmem>>, %arg3: memref<2x32xf32, #tpu.memory_space<vmem>>, %arg4: memref<1x32x256xf32, #tpu.memory_space<vmem>>) attributes {dimension_semantics = [#tpu.dimension_semantics<parallel>], iteration_bounds = array<i64: 2>, scalar_prefetch = 0 : i64, scratch_operands = 0 : i64, tpu.core_type = #tpu.core_type<tc>, window_params = [{transform_indices = @transform_0, window_bounds = array<i64: 1, 32, 256>}, {pipeline_mode = #tpu.pipeline_mode<synchronous>, transform_indices = @transform_1, window_bounds = array<i64: 32, 2>}, {pipeline_mode = #tpu.pipeline_mode<synchronous>, transform_indices = @transform_2, window_bounds = array<i64: 2, 32>}, {transform_indices = @transform_3, window_bounds = array<i64: 1, 32, 256>}]} {
    %c0 = arith.constant 0 : index
    %c0_0 = arith.constant 0 : index
    %c0_1 = arith.constant 0 : index
    %0 = vector.load %arg1[%c0, %c0_0, %c0_1] : memref<1x32x256xf32, #tpu.memory_space<vmem>>, vector<1x32x256xf32>
    %cst = arith.constant dense<0.000000e+00> : vector<1x32xf32>
    %1 = vector.multi_reduction <add>, %0, %cst [2] : vector<1x32x256xf32> to vector<1x32xf32>
    %cst_2 = arith.constant 2.560000e+02 : f32
    %2 = vector.broadcast %cst_2 : f32 to vector<1x32xf32>
    %3 = arith.divf %1, %2 : vector<1x32xf32>
    %c0_3 = arith.constant 0 : index
    %c0_4 = arith.constant 0 : index
    %4 = vector.load %arg2[%c0_3, %c0_4] : memref<32x2xf32, #tpu.memory_space<vmem>>, vector<32x2xf32>
    %cst_5 = arith.constant dense<0.000000e+00> : vector<1x2xf32>
    %5 = tpu.matmul %3, %4, %cst_5 {dimension_numbers = #tpu.dot_dimension_numbers<[1], [0], [0], [1], [0, 0, 1, 1], [], []>} : vector<1x32xf32>, vector<32x2xf32>, vector<1x2xf32> -> vector<1x2xf32>
    %cst_6 = arith.constant 0.000000e+00 : f32
    %6 = vector.broadcast %cst_6 : f32 to vector<1x2xf32>
    %7 = arith.maximumf %5, %6 : vector<1x2xf32>
    %c0_7 = arith.constant 0 : index
    %c0_8 = arith.constant 0 : index
    %8 = vector.load %arg3[%c0_7, %c0_8] : memref<2x32xf32, #tpu.memory_space<vmem>>, vector<2x32xf32>
    %cst_9 = arith.constant dense<0.000000e+00> : vector<1x32xf32>
    %9 = tpu.matmul %7, %8, %cst_9 {dimension_numbers = #tpu.dot_dimension_numbers<[1], [0], [0], [1], [0, 0, 1, 1], [], []>} : vector<1x2xf32>, vector<2x32xf32>, vector<1x32xf32> -> vector<1x32xf32>
    %10 = arith.negf %9 : vector<1x32xf32>
    %11 = math.exp %10 : vector<1x32xf32>
    %cst_10 = arith.constant 1.000000e+00 : f32
    %12 = vector.broadcast %cst_10 : f32 to vector<1x32xf32>
    %13 = arith.addf %12, %11 : vector<1x32xf32>
    %14 = arith.divf %12, %13 : vector<1x32xf32>
    %15 = vector.shape_cast %14 : vector<1x32xf32> to vector<1x32x1xf32>
    %16 = vector.broadcast %15 : vector<1x32x1xf32> to vector<1x32x256xf32>
    %17 = arith.mulf %0, %16 : vector<1x32x256xf32>
    %c0_11 = arith.constant 0 : index
    %c0_12 = arith.constant 0 : index
    %c0_13 = arith.constant 0 : index
    %18 = vector.load %arg4[%c0_11, %c0_12, %c0_13] : memref<1x32x256xf32, #tpu.memory_space<vmem>>, vector<1x32x256xf32>
    tpu.vector_store %arg4[%c0_11, %c0_12, %c0_13], %17 {strides = array<i32>} : memref<1x32x256xf32, #tpu.memory_space<vmem>>, vector<1x32x256xf32>,
    return
  }
  func.func @transform_0(%arg0: i32) -> (i32, i32, i32) {
    %c0_i32 = arith.constant 0 : i32
    %c0_i32_0 = arith.constant 0 : i32
    %c0_i32_1 = arith.constant 0 : i32
    return %arg0, %c0_i32, %c0_i32_0 : i32, i32, i32
  }
  func.func @transform_1(%arg0: i32) -> (i32, i32) {
    %c0_i32 = arith.constant 0 : i32
    %c0_i32_0 = arith.constant 0 : i32
    %c0_i32_1 = arith.constant 0 : i32
    return %c0_i32, %c0_i32_0 : i32, i32
  }
  func.func @transform_2(%arg0: i32) -> (i32, i32) {
    %c0_i32 = arith.constant 0 : i32
    %c0_i32_0 = arith.constant 0 : i32
    %c0_i32_1 = arith.constant 0 : i32
    return %c0_i32, %c0_i32_0 : i32, i32
  }
  func.func @transform_3(%arg0: i32) -> (i32, i32, i32) {
    %c0_i32 = arith.constant 0 : i32
    %c0_i32_0 = arith.constant 0 : i32
    %c0_i32_1 = arith.constant 0 : i32
    return %arg0, %c0_i32, %c0_i32_0 : i32, i32, i32
  }
}

</mosaic_0001>

<llo_original>
// kernel: tpu_custom_call.1
$region0: #{tpu_custom_call.1}
  #allocation0 [shape = 'u32[]', space=smem, size = 0x4, offset = 0x4, fixed_abs, tag = 'smem constant byte address 0x4 - core index']
  #allocation1 [shape = 'u32[144,128]{1,0:T(1,128)}', space=vmem, size = 0x12000, scoped, tag = 'internal scratch']
  %s0 = inlined_call_operand.hbm [shape: f32[2,32,256], index: 0, kind: input, shape index: {}]
  %s1 = inlined_call_operand.hbm [shape: f32[32,2], index: 1, kind: input, shape index: {}]
  %s2 = inlined_call_operand.hbm [shape: f32[2,32], index: 2, kind: input, shape index: {}]
  %s3 = inlined_call_operand.hbm [shape: f32[2,32,256], index: 3, kind: output, shape index: {}]
  %s4 = sld [smem:[#allocation0]]
  $region57: #{tpu_custom_call.1} parent=0
    _
  %s6 = ssub.s32 1, %s4
  %s7 = scalar_select 0, %s6, %s4
  $region1: #{tpu_custom_call.1} parent=0
    #allocation2 [shape = 'u8[65536]{0}', space=vmem, size = 0x10000, scoped, tag = 'input window, operand 0']
    #allocation3 [shape = 's32[2]{0}', space=sflag, size = 0x8, scoped, tag = 'scoped memory for tpu_custom_call.1']
    #allocation4 [shape = 's32[2]{0}', space=sflag, size = 0x8, scoped, tag = 'scoped memory for tpu_custom_call.1']
    #allocation5 [shape = 'u8[16384]{0}', space=vmem, size = 0x4000, scoped, tag = 'input window, operand 1, single buffered']
    #allocation6 [shape = 's32[1]{0}', space=sflag, size = 0x4, scoped, tag = 'scoped memory for tpu_custom_call.1']
    #allocation7 [shape = 'u8[1024]{0}', space=vmem, size = 0x400, scoped, tag = 'input window, operand 2, single buffered']
    #allocation8 [shape = 'u8[65536]{0}', space=vmem, size = 0x10000, scoped, tag = 'output window, operand 0']
    %8 = vsyncpa [#allocation3], 0
    %s9 = scalar_lea.sflag [#allocation3], 1
    %10 = vsyncpa %s9, 0
    %11 = vsyncpa [#allocation6], 0
    %12 = vsyncpa [#allocation4], 0
    %s13 = scalar_lea.sflag [#allocation4], 1
    %14 = vsyncpa %s13, 0
    loop: start=0, step=1, limit=4
    $region2: #{tpu_custom_call.1} parent=1 // loop_pre_header
      _
    $region3: #{tpu_custom_call.1} parent=1 // loop_header
      %s16 = sphi 0, %s20
      %p17 = scmp.ge.s32.totalorder %s16, 4
      %s26 = sphi 0, %s28
      %s29 = sphi 0, %s26
      %s30 = sphi 0, %s29
      %s46 = sphi 0, %s30
      %s50 = sphi 0, %s50
      %s52 = sphi 0, %s50
      %s53 = sphi 0, %s52
      %s67 = sphi 0, %s53
      %s71 = sphi 0, %s71
      %s73 = sphi 0, %s71
      %s74 = sphi 0, %s73
      %s88 = sphi 0, %s74
      %s94 = sphi 0, %s96
      %s97 = sphi 0, %s94
      %s98 = sphi 0, %s97
      %s114 = sphi 0, %s98
    $region4: #{tpu_custom_call.1} parent=1 // loop_header_branch
      %19 = sbr.rel (%p17) target = $region8
    $region5: #{tpu_custom_call.1} parent=1 // loop_body
      %s21 = ssub.s32 %s16, 1
      %s22 = ssub.s32 %s16, 2
      %s23 = sadd.s32 %s16, 1
      %s24 = ssub.s32 %s16, %s23
      %p25 = scmp.eq.s32.totalorder %s24, 0
      %s27 = sadd.s32 %s26, 1
      %s28 = scalar_select %p25, %s26, %s27
      %p31 = pneg %p25
      %p32 = scmp.eq.s32.totalorder %s16, 1
      %p33 = por %p31, %p32
      %p34 = scmp.ne.s32.totalorder %s26, %s29
      %p35 = scmp.eq.s32.totalorder %s16, 0
      %p36 = por %p34, %p35
      %p37 = scmp.ne.s32.totalorder %s26, %s29
      %p38 = scmp.eq.s32.totalorder %s21, 1
      %p39 = por %p37, %p38
      %p40 = scmp.ne.s32.totalorder %s29, %s30
      %p41 = scmp.eq.s32.totalorder %s21, 0
      %p42 = por %p40, %p41
      %p43 = scmp.ne.s32.totalorder %s29, %s30
      %p44 = scmp.eq.s32.totalorder %s22, 1
      %p45 = por %p43, %p44
      %p47 = scmp.ne.s32.totalorder %s30, %s46
      %p48 = scmp.eq.s32.totalorder %s22, 0
      %p49 = por %p47, %p48
      %s51 = sadd.s32 %s50, 1
      %p54 = scmp.eq.s32.totalorder %s16, 1
      %p55 = scmp.ne.s32.totalorder %s50, %s52
      %p56 = scmp.eq.s32.totalorder %s16, 0
      %p57 = por %p55, %p56
      %p58 = scmp.ne.s32.totalorder %s50, %s52
      %p59 = scmp.eq.s32.totalorder %s21, 1
      %p60 = por %p58, %p59
      %p61 = scmp.ne.s32.totalorder %s52, %s53
      %p62 = scmp.eq.s32.totalorder %s21, 0
      %p63 = por %p61, %p62
      %p64 = scmp.ne.s32.totalorder %s52, %s53
      %p65 = scmp.eq.s32.totalorder %s22, 1
      %p66 = por %p64, %p65
      %p68 = scmp.ne.s32.totalorder %s53, %s67
      %p69 = scmp.eq.s32.totalorder %s22, 0
      %p70 = por %p68, %p69
      %s72 = sadd.s32 %s71, 1
      %p75 = scmp.eq.s32.totalorder %s16, 1
      %p76 = scmp.ne.s32.totalorder %s71, %s73
      %p77 = scmp.eq.s32.totalorder %s16, 0
      %p78 = por %p76, %p77
      %p79 = scmp.ne.s32.totalorder %s71, %s73
      %p80 = scmp.eq.s32.totalorder %s21, 1
      %p81 = por %p79, %p80
      %p82 = scmp.ne.s32.totalorder %s73, %s74
      %p83 = scmp.eq.s32.totalorder %s21, 0
      %p84 = por %p82, %p83
      %p85 = scmp.ne.s32.totalorder %s73, %s74
      %p86 = scmp.eq.s32.totalorder %s22, 1
      %p87 = por %p85, %p86
      %p89 = scmp.ne.s32.totalorder %s74, %s88
      %p90 = scmp.eq.s32.totalorder %s22, 0
      %p91 = por %p89, %p90
      %s92 = ssub.s32 %s16, %s23
      %p93 = scmp.eq.s32.totalorder %s92, 0
      %s95 = sadd.s32 %s94, 1
      %s96 = scalar_select %p93, %s94, %s95
      %p99 = pneg %p93
      %p100 = scmp.eq.s32.totalorder %s16, 1
      %p101 = por %p99, %p100
      %p102 = scmp.ne.s32.totalorder %s94, %s97
      %p103 = scmp.eq.s32.totalorder %s16, 0
      %p104 = por %p102, %p103
      %p105 = scmp.ne.s32.totalorder %s94, %s97
      %p106 = scmp.eq.s32.totalorder %s21, 1
      %p107 = por %p105, %p106
      %p108 = scmp.ne.s32.totalorder %s97, %s98
      %p109 = scmp.eq.s32.totalorder %s21, 0
      %p110 = por %p108, %p109
      %p111 = scmp.ne.s32.totalorder %s97, %s98
      %p112 = scmp.eq.s32.totalorder %s22, 1
      %p113 = por %p111, %p112
      %p115 = scmp.ne.s32.totalorder %s98, %s114
      %p116 = scmp.eq.s32.totalorder %s22, 0
      %p117 = por %p115, %p116
      %p118 = scmp.le.s32.totalorder 1, %s16
      %p119 = scmp.lt.s32.totalorder %s16, 3
      %p120 = pnand %p118, %p119
      %p121 = pneg %p120
      // Predicated region
      $region9: #{tpu_custom_call.1} parent=5 // pred_check
        _
      $region10: #{tpu_custom_call.1} parent=5 // pred_check_branch
        %123 = sbr.rel (%p120) target = $region12
      $region11: #{tpu_custom_call.1} parent=5 // pred_region
        %s124 = ssub.s32 %s16, 1
        // Predicated region
        $region13: #{tpu_custom_call.1} parent=11 // pred_check
          %p125 = pneg %p63
        $region14: #{tpu_custom_call.1} parent=11 // pred_check_branch
          %127 = sbr.rel (%p125) target = $region16
        $region15: #{tpu_custom_call.1} parent=11 // pred_region
          %s129 = ssub.s32 512, 512
          %130 = vsyncadd [#allocation6], %s129
          %s131 = sshll.u32 [#allocation5], 4
          %s132 = int_to_ptr.vmem [resolvable:$true] %s131
          %137 = dma.hbm_to_vmem [thread:$0]  %s1, 512, %s132, [#allocation6], 128, 128, 8
        $region16: #{tpu_custom_call.1} parent=11 // pred_fallthru
          _
        // Predicated region
        $region17: #{tpu_custom_call.1} parent=11 // pred_check
          %p138 = pneg %p84
        $region18: #{tpu_custom_call.1} parent=11 // pred_check_branch
          %140 = sbr.rel (%p138) target = $region20
        $region19: #{tpu_custom_call.1} parent=11 // pred_region
          %s142 = ssub.s32 32, 32
          %143 = vsyncadd [#allocation6], %s142
          %s145 = sshll.u32 [#allocation7], 4
          %s146 = int_to_ptr.vmem [resolvable:$true] %s145
          %148 = dma.hbm_to_vmem [thread:$0]  %s2, 32, %s146, [#allocation6]
        $region20: #{tpu_custom_call.1} parent=11 // pred_fallthru
          _
      $region12: #{tpu_custom_call.1} parent=5 // pred_fallthru
        _
      %p149 = scmp.lt.s32.totalorder %s16, 2
      // Predicated region
      $region21: #{tpu_custom_call.1} parent=5 // pred_check
        %p150 = pneg %p149
      $region22: #{tpu_custom_call.1} parent=5 // pred_check_branch
        %152 = sbr.rel (%p150) target = $region24
      $region23: #{tpu_custom_call.1} parent=5 // pred_region
        // Predicated region
        $region25: #{tpu_custom_call.1} parent=23 // pred_check
          %p153 = pneg %p36
        $region26: #{tpu_custom_call.1} parent=23 // pred_check_branch
          %155 = sbr.rel (%p153) target = $region28
        $region27: #{tpu_custom_call.1} parent=23 // pred_region
          %s156 = sand.u32 %s26, 1
          %s157 = scalar_lea.sflag [#allocation3], %s156
          %s158 = sand.u32 %s26, 1
          %s159 = smul.addr %s158, 64
          %s160 = scalar_lea.vmem [#allocation2], %s159
          %s162 = ssub.s32 1024, 1024
          %163 = vsyncadd %s157, %s162
          %s164 = smul.addr %s16, 8
          %s165 = smul.addr %s164, 128
          %s166 = scalar_lea.hbm %s0, %s165
          %s167 = sshll.u32 %s160, 4
          %s168 = int_to_ptr.vmem [resolvable:$true] %s167
          %173 = dma.hbm_to_vmem [thread:$0]  %s166, 1024, %s168, %s157, 256, 256, 16
        $region28: #{tpu_custom_call.1} parent=23 // pred_fallthru
          _
      $region24: #{tpu_custom_call.1} parent=5 // pred_fallthru
        _
      %p174 = scmp.le.s32.totalorder 1, %s16
      %p175 = scmp.lt.s32.totalorder %s16, 3
      %p176 = pnand %p174, %p175
      %p177 = pneg %p176
      // Predicated region
      $region29: #{tpu_custom_call.1} parent=5 // pred_check
        _
      $region30: #{tpu_custom_call.1} parent=5 // pred_check_branch
        %179 = sbr.rel (%p176) target = $region32
      $region31: #{tpu_custom_call.1} parent=5 // pred_region
        %s180 = ssub.s32 %s16, 1
        %s181 = sand.u32 %s29, 1
        %s182 = scalar_lea.sflag [#allocation3], %s181
        %s183 = sand.u32 %s29, 1
        %s184 = smul.addr %s183, 64
        %s185 = scalar_lea.vmem [#allocation2], %s184
        // Predicated region
        $region33: #{tpu_custom_call.1} parent=31 // pred_check
          %p186 = pneg %p42
        $region34: #{tpu_custom_call.1} parent=31 // pred_check_branch
          %188 = sbr.rel (%p186) target = $region36
        $region35: #{tpu_custom_call.1} parent=31 // pred_region
          %189 = dma.done %s182, 1024
        $region36: #{tpu_custom_call.1} parent=31 // pred_fallthru
          _
        // Predicated region
        $region37: #{tpu_custom_call.1} parent=31 // pred_check
          %p190 = pneg %p63
        $region38: #{tpu_custom_call.1} parent=31 // pred_check_branch
          %192 = sbr.rel (%p190) target = $region40
        $region39: #{tpu_custom_call.1} parent=31 // pred_region
          %193 = dma.done [#allocation6], 512
        $region40: #{tpu_custom_call.1} parent=31 // pred_fallthru
          _
        // Predicated region
        $region41: #{tpu_custom_call.1} parent=31 // pred_check
          %p194 = pneg %p84
        $region42: #{tpu_custom_call.1} parent=31 // pred_check_branch
          %196 = sbr.rel (%p194) target = $region44
        $region43: #{tpu_custom_call.1} parent=31 // pred_region
          %197 = dma.done [#allocation6], 32
        $region44: #{tpu_custom_call.1} parent=31 // pred_fallthru
          _
        %s198 = sand.u32 %s29, 1
        %s199 = scalar_lea.sflag [#allocation3], %s198
        %s200 = sand.u32 %s29, 1
        %s201 = smul.addr %s200, 64
        %s202 = scalar_lea.vmem [#allocation2], %s201
        %p203 = pneg %p42
        %p204 = pneg %p39
        %p205 = pneg %p63
        %p206 = pneg %p60
        %p207 = pneg %p84
        %p208 = pneg %p81
        %p209 = pneg %p110
        %p210 = pneg %p107
        %s211 = sand.u32 %s97, 1
        %s212 = scalar_lea.sflag [#allocation4], %s211
        %s213 = sand.u32 %s97, 1
        %s214 = smul.addr %s213, 64
        %s215 = scalar_lea.vmem [#allocation8], %s214
        %v216 = vld [vmem:[%s185] sm:$0xff]
        %v217 = vld [vmem:[%s185 + $0x8] sm:$0xff]
        %v218 = vld [vmem:[%s185 + $0x10] sm:$0xff]
        %v219 = vld [vmem:[%s185 + $0x18] sm:$0xff]
        %v220 = vld [vmem:[%s185 + $0x20] sm:$0xff]
        %v221 = vld [vmem:[%s185 + $0x28] sm:$0xff]
        %v222 = vld [vmem:[%s185 + $0x30] sm:$0xff]
        %v223 = vld [vmem:[%s185 + $0x38] sm:$0xff]
        %v224 = vadd.f32 %v216, %v217
        %225 = vadd.xlane.f32.xlu0 %v224
        %v226 = vpop.xlane.xlu0 %225
        %v227 = vadd.f32 %v218, %v219
        %228 = vadd.xlane.f32.xlu0 %v227
        %v229 = vpop.xlane.xlu0 %228
        %v230 = vadd.f32 %v220, %v221
        %231 = vadd.xlane.f32.xlu0 %v230
        %v232 = vpop.xlane.xlu0 %231
        %v233 = vadd.f32 %v222, %v223
        %234 = vadd.xlane.f32.xlu0 %v233
        %v235 = vpop.xlane.xlu0 %234
        %v236 = vrcp.pop 256.0
        %v237 = vmul.f32 %v226, %v236
        %v238 = vmul.f32 %v229, %v236
        %v239 = vmul.f32 %v232, %v236
        %v240 = vmul.f32 %v235, %v236
        %v241 = vld [vmem:[#allocation5] sm:$0xff]
        %v242 = vld [vmem:[#allocation5 + $0x8] sm:$0xff]
        %v243 = vld [vmem:[#allocation5 + $0x10] sm:$0xff]
        %v244 = vld [vmem:[#allocation5 + $0x18] sm:$0xff]
        %v249 = vlaneseq
        %v250 = vand.u32 %v249, 127
        %v251 = vlaneseq
        %v252 = vshrl.u32 %v251, 7
        %v253 = vsub.s32 %v250, %v252
        %v254 = vrot.slane %v237, %v253
        %v255 = vadd.s32 %v250, 4294967288
        %v256 = vlaneseq
        %v257 = vshrl.u32 %v256, 7
        %v258 = vsub.s32 %v255, %v257
        %v259 = vrot.slane %v238, %v258
        %vm260 = vcmask 130112
        %v261 = vsel %vm260, %v259, %v254
        %v262 = vadd.s32 %v250, 4294967280
        %v263 = vlaneseq
        %v264 = vshrl.u32 %v263, 7
        %v265 = vsub.s32 %v262, %v264
        %v266 = vrot.slane %v239, %v265
        %vm267 = vcmask 195712
        %v268 = vsel %vm267, %v266, %v261
        %v269 = vadd.s32 %v250, 4294967272
        %v270 = vlaneseq
        %v271 = vshrl.u32 %v270, 7
        %v272 = vsub.s32 %v269, %v271
        %v273 = vrot.slane %v240, %v272
        %vm274 = vcmask 261312
        %v275 = vsel %vm274, %v273, %v268
        %vm276 = vcmask 261120
        %v277 = vsel %vm276, %v275, 0
        %279 = vmatprep.subr.mxu0 0.0
        %280 = vmatpush1.msra.mxu0 %v241
        %281 = vmatprep.subr.mxu0 0.0
        %282 = vmatpush1.msra.mxu0 %v242
        %283 = vmatprep.subr.mxu0 0.0
        %284 = vmatpush1.msra.mxu0 %v243
        %285 = vmatprep.subr.mxu0 0.0
        %286 = vmatpush1.msra.mxu0 %v244
        %287 = vmatprep.subr.mxu0 0.0
        %288 = vmatpush1.msra.mxu0 0.0
        %289 = vmatprep.subr.mxu0 0.0
        %290 = vmatpush1.msra.mxu0 0.0
        %291 = vmatprep.subr.mxu0 0.0
        %292 = vmatpush1.msra.mxu0 0.0
        %293 = vmatprep.subr.mxu0 0.0
        %294 = vmatpush1.msra.mxu0 0.0
        %295 = vmatprep.subr.mxu0 0.0
        %296 = vmatpush1.msra.mxu0 0.0
        %297 = vmatprep.subr.mxu0 0.0
        %298 = vmatpush1.msra.mxu0 0.0
        %299 = vmatprep.subr.mxu0 0.0
        %300 = vmatpush1.msra.mxu0 0.0
        %301 = vmatprep.subr.mxu0 0.0
        %302 = vmatpush1.msra.mxu0 0.0
        %303 = vmatprep.subr.mxu0 0.0
        %304 = vmatpush1.msra.mxu0 0.0
        %305 = vmatprep.subr.mxu0 0.0
        %306 = vmatpush1.msra.mxu0 0.0
        %307 = vmatprep.subr.mxu0 0.0
        %308 = vmatpush1.msra.mxu0 0.0
        %309 = vmatprep.subr.mxu0 0.0
        %310 = vmatpush1.msra.mxu0 0.0
        %311 = vmatprep.subr.mxu0 0.0
        %312 = vmatpush1.msra.mxu0 0.0
        %313 = vmatprep.subr.mxu0 0.0
        %314 = vmatpush1.msra.mxu0 0.0
        %315 = vmatprep.subr.mxu0 0.0
        %316 = vmatpush1.msra.mxu0 0.0
        %317 = vmatprep.subr.mxu0 0.0
        %318 = vmatpush1.msra.mxu0 0.0
        %319 = vmatprep.subr.mxu0 0.0
        %320 = vmatpush1.msra.mxu0 0.0
        %321 = vmatprep.subr.mxu0 0.0
        %322 = vmatpush1.msra.mxu0 0.0
        %323 = vmatprep.subr.mxu0 0.0
        %324 = vmatpush1.msra.mxu0 0.0
        %325 = vmatprep.subr.mxu0 0.0
        %326 = vmatpush1.msra.mxu0 0.0
        %327 = vmatprep.subr.mxu0 0.0
        %328 = vmatpush1.msra.mxu0 0.0
        %329 = vmatprep.subr.mxu0 0.0
        %330 = vmatpush1.msra.mxu0 0.0
        %331 = vmatprep.subr.mxu0 0.0
        %332 = vmatpush1.msra.mxu0 0.0
        %333 = vmatprep.subr.mxu0 0.0
        %334 = vmatpush1.msra.mxu0 0.0
        %335 = vmatprep.subr.mxu0 0.0
        %336 = vmatpush1.msra.mxu0 0.0
        %337 = vmatprep.subr.mxu0 0.0
        %338 = vmatpush1.msra.mxu0 0.0
        %339 = vmatprep.subr.mxu0 0.0
        %340 = vmatpush1.msra.mxu0 0.0
        %341 = vmatprep.subr.mxu0 0.0
        %342 = vmatpush1.msra.mxu0 0.0
        %343 = vmatprep.mubr.f32.mxu0 0.0
        %344 = vmatmul.mubr.f32.gmra.mrb[0].mxu0 %v277
        %v345 = vpop.f32.mrb[0].mxu0
        %v346 = vadd.f32 0.0, %v345
        %v347 = vpop.f32.mrb[0].mxu0
        %348 = vdwg.mxu0
        %v349 = vmax.f32 %v346, 0.0
        %v350 = vld [vmem:[#allocation7] sm:$0x3]
        %vm351 = vcmask 15360
        %v353 = vsel %vm351, %v349, 0
        %vm355 = vcmask 1041408
        %v357 = vsel %vm355, %v350, 0
        %359 = vmatprep.subr.mxu0 0.0
        %360 = vmatpush1.msra.mxu0 %v357
        %361 = vmatprep.subr.mxu0 0.0
        %362 = vmatpush1.msra.mxu0 0.0
        %363 = vmatprep.subr.mxu0 0.0
        %364 = vmatpush1.msra.mxu0 0.0
        %365 = vmatprep.subr.mxu0 0.0
        %366 = vmatpush1.msra.mxu0 0.0
        %367 = vmatprep.subr.mxu0 0.0
        %368 = vmatpush1.msra.mxu0 0.0
        %369 = vmatprep.subr.mxu0 0.0
        %370 = vmatpush1.msra.mxu0 0.0
        %371 = vmatprep.subr.mxu0 0.0
        %372 = vmatpush1.msra.mxu0 0.0
        %373 = vmatprep.subr.mxu0 0.0
        %374 = vmatpush1.msra.mxu0 0.0
        %375 = vmatprep.subr.mxu0 0.0
        %376 = vmatpush1.msra.mxu0 0.0
        %377 = vmatprep.subr.mxu0 0.0
        %378 = vmatpush1.msra.mxu0 0.0
        %379 = vmatprep.subr.mxu0 0.0
        %380 = vmatpush1.msra.mxu0 0.0
        %381 = vmatprep.subr.mxu0 0.0
        %382 = vmatpush1.msra.mxu0 0.0
        %383 = vmatprep.subr.mxu0 0.0
        %384 = vmatpush1.msra.mxu0 0.0
        %385 = vmatprep.subr.mxu0 0.0
        %386 = vmatpush1.msra.mxu0 0.0
        %387 = vmatprep.subr.mxu0 0.0
        %388 = vmatpush1.msra.mxu0 0.0
        %389 = vmatprep.subr.mxu0 0.0
        %390 = vmatpush1.msra.mxu0 0.0
        %391 = vmatprep.subr.mxu0 0.0
        %392 = vmatpush1.msra.mxu0 0.0
        %393 = vmatprep.subr.mxu0 0.0
        %394 = vmatpush1.msra.mxu0 0.0
        %395 = vmatprep.subr.mxu0 0.0
        %396 = vmatpush1.msra.mxu0 0.0
        %397 = vmatprep.subr.mxu0 0.0
        %398 = vmatpush1.msra.mxu0 0.0
        %399 = vmatprep.subr.mxu0 0.0
        %400 = vmatpush1.msra.mxu0 0.0
        %401 = vmatprep.subr.mxu0 0.0
        %402 = vmatpush1.msra.mxu0 0.0
        %403 = vmatprep.subr.mxu0 0.0
        %404 = vmatpush1.msra.mxu0 0.0
        %405 = vmatprep.subr.mxu0 0.0
        %406 = vmatpush1.msra.mxu0 0.0
        %407 = vmatprep.subr.mxu0 0.0
        %408 = vmatpush1.msra.mxu0 0.0
        %409 = vmatprep.subr.mxu0 0.0
        %410 = vmatpush1.msra.mxu0 0.0
        %411 = vmatprep.subr.mxu0 0.0
        %412 = vmatpush1.msra.mxu0 0.0
        %413 = vmatprep.subr.mxu0 0.0
        %414 = vmatpush1.msra.mxu0 0.0
        %415 = vmatprep.subr.mxu0 0.0
        %416 = vmatpush1.msra.mxu0 0.0
        %417 = vmatprep.subr.mxu0 0.0
        %418 = vmatpush1.msra.mxu0 0.0
        %419 = vmatprep.subr.mxu0 0.0
        %420 = vmatpush1.msra.mxu0 0.0
        %421 = vmatprep.subr.mxu0 0.0
        %422 = vmatpush1.msra.mxu0 0.0
        %423 = vmatprep.mubr.f32.mxu0 0.0
        %424 = vmatmul.mubr.f32.gmra.mrb[0].mxu0 %v353
        %v425 = vpop.f32.mrb[0].mxu0
        %v426 = vadd.f32 0.0, %v425
        %v427 = vpop.f32.mrb[0].mxu0
        %428 = vdwg.mxu0
        %v429 = vxor.u32 %v426, 2147483648
        %v430 = vmul.f32 %v429, 1.442695
        %v431 = vpow.pop %v430
        %v432 = vadd.f32 %v431, 1.0
        %v433 = vrcp.pop %v432
        %v434 = vmul.f32 1.0, %v433
        %v435 = vlaneseq
        %v436 = vshrl.u32 %v435, 7
        %v437 = vsub.s32 0, %v436
        %v438 = vrot.slane %v434, %v437
        %440 = vbcast.lane.b32.xlu0 %v438, 256
        %v441 = vpop.permute.xlu0 %440
        %s443 = sor.u32 256, 8
        %444 = vbcast.lane.b32.xlu0 %v438, %s443
        %v445 = vpop.permute.xlu0 %444
        %s447 = sor.u32 256, 16
        %448 = vbcast.lane.b32.xlu0 %v438, %s447
        %v449 = vpop.permute.xlu0 %448
        %s451 = sor.u32 256, 24
        %452 = vbcast.lane.b32.xlu0 %v438, %s451
        %v453 = vpop.permute.xlu0 %452
        %v454 = vmul.f32 %v216, %v441
        %v455 = vmul.f32 %v217, %v441
        %v456 = vmul.f32 %v218, %v445
        %v457 = vmul.f32 %v219, %v445
        %v458 = vmul.f32 %v220, %v449
        %v459 = vmul.f32 %v221, %v449
        %v460 = vmul.f32 %v222, %v453
        %v461 = vmul.f32 %v223, %v453
        %462 = vst [vmem:[%s215] sm:$0xff] %v454
        %463 = vst [vmem:[%s215 + $0x8] sm:$0xff] %v455
        %464 = vst [vmem:[%s215 + $0x10] sm:$0xff] %v456
        %465 = vst [vmem:[%s215 + $0x18] sm:$0xff] %v457
        %466 = vst [vmem:[%s215 + $0x20] sm:$0xff] %v458
        %467 = vst [vmem:[%s215 + $0x28] sm:$0xff] %v459
        %468 = vst [vmem:[%s215 + $0x30] sm:$0xff] %v460
        %469 = vst [vmem:[%s215 + $0x38] sm:$0xff] %v461
        %s470 = sand.u32 %s97, 1
        %s471 = scalar_lea.sflag [#allocation4], %s470
        %s472 = sand.u32 %s97, 1
        %s473 = smul.addr %s472, 64
        %s474 = scalar_lea.vmem [#allocation8], %s473
        // Predicated region
        $region45: #{tpu_custom_call.1} parent=31 // pred_check
          %p475 = pneg %p107
        $region46: #{tpu_custom_call.1} parent=31 // pred_check_branch
          %477 = sbr.rel (%p475) target = $region48
        $region47: #{tpu_custom_call.1} parent=31 // pred_region
          %s479 = ssub.s32 1024, 1024
          %480 = vsyncadd %s471, %s479
          %s481 = smul.addr %s21, 8
          %s482 = smul.addr %s481, 128
          %s483 = scalar_lea.hbm %s3, %s482
          %s484 = sshll.u32 %s474, 4
          %s485 = int_to_ptr.vmem [resolvable:$true] %s484
          %490 = dma.vmem_to_hbm [thread:$0]  %s485, 1024, %s483, %s471, 256, 256, 16
        $region48: #{tpu_custom_call.1} parent=31 // pred_fallthru
          _
      $region32: #{tpu_custom_call.1} parent=5 // pred_fallthru
        _
      %p491 = scmp.le.s32.totalorder 2, %s16
      // Predicated region
      $region49: #{tpu_custom_call.1} parent=5 // pred_check
        %p492 = pneg %p491
      $region50: #{tpu_custom_call.1} parent=5 // pred_check_branch
        %494 = sbr.rel (%p492) target = $region52
      $region51: #{tpu_custom_call.1} parent=5 // pred_region
        %s495 = ssub.s32 %s16, 2
        // Predicated region
        $region53: #{tpu_custom_call.1} parent=51 // pred_check
          %p496 = pneg %p113
        $region54: #{tpu_custom_call.1} parent=51 // pred_check_branch
          %498 = sbr.rel (%p496) target = $region56
        $region55: #{tpu_custom_call.1} parent=51 // pred_region
          %s499 = sand.u32 %s98, 1
          %s500 = scalar_lea.sflag [#allocation4], %s499
          %s501 = sand.u32 %s98, 1
          %s502 = smul.addr %s501, 64
          %s503 = scalar_lea.vmem [#allocation8], %s502
          %504 = dma.done %s500, 1024
        $region56: #{tpu_custom_call.1} parent=51 // pred_fallthru
          _
      $region52: #{tpu_custom_call.1} parent=5 // pred_fallthru
        _
    $region6: #{tpu_custom_call.1} parent=1 // loop_footer
      %s20 = sadd.s32 1, %s16
    $region7: #{tpu_custom_call.1} parent=1 // loop_footer_branch
      %15 = sbr.rel target = $region3
    $region8: #{tpu_custom_call.1} parent=1 // loop_exit
      _
    %505 = vsyncpa [#allocation3], 1
    %s506 = scalar_lea.sflag [#allocation3], 1
    %507 = vsyncpa %s506, 1
    %508 = vsyncpa [#allocation6], 1
    %509 = vsyncpa [#allocation4], 1
    %s510 = scalar_lea.sflag [#allocation4], 1
    %511 = vsyncpa %s510, 1

// kernel: tpu_custom_call.1
$region0: #{tpu_custom_call.1}
  #allocation0 [shape = 'u32[]', space=smem, size = 0x4, offset = 0x4, fixed_abs, tag = 'smem constant byte address 0x4 - core index']
  #allocation1 [shape = 'u32[144,128]{1,0:T(1,128)}', space=vmem, size = 0x12000, scoped, tag = 'internal scratch']
  %s0 = inlined_call_operand.hbm [shape: f32[2,32,256], index: 0, kind: input, shape index: {}]
  %s1 = inlined_call_operand.hbm [shape: f32[32,2], index: 1, kind: input, shape index: {}]
  %s2 = inlined_call_operand.hbm [shape: f32[2,32], index: 2, kind: input, shape index: {}]
  %s3 = inlined_call_operand.hbm [shape: f32[2,32,256], index: 3, kind: output, shape index: {}]
  %s4 = sld [smem:[#allocation0]]
  $region57: #{tpu_custom_call.1} parent=0
    _
  %s6 = ssub.s32 1, %s4
  %s7 = scalar_select 0, %s6, %s4
  $region1: #{tpu_custom_call.1} parent=0
    #allocation2 [shape = 'u8[65536]{0}', space=vmem, size = 0x10000, scoped, tag = 'input window, operand 0']
    #allocation3 [shape = 's32[2]{0}', space=sflag, size = 0x8, scoped, tag = 'scoped memory for tpu_custom_call.1']
    #allocation4 [shape = 's32[2]{0}', space=sflag, size = 0x8, scoped, tag = 'scoped memory for tpu_custom_call.1']
    #allocation5 [shape = 'u8[16384]{0}', space=vmem, size = 0x4000, scoped, tag = 'input window, operand 1, single buffered']
    #allocation6 [shape = 's32[1]{0}', space=sflag, size = 0x4, scoped, tag = 'scoped memory for tpu_custom_call.1']
    #allocation7 [shape = 'u8[1024]{0}', space=vmem, size = 0x400, scoped, tag = 'input window, operand 2, single buffered']
    #allocation8 [shape = 'u8[65536]{0}', space=vmem, size = 0x10000, scoped, tag = 'output window, operand 0']
    %8 = vsyncpa [#allocation3], 0
    %s9 = scalar_lea.sflag [#allocation3], 1
    %10 = vsyncpa %s9, 0
    %11 = vsyncpa [#allocation6], 0
    %12 = vsyncpa [#allocation4], 0
    %s13 = scalar_lea.sflag [#allocation4], 1
    %14 = vsyncpa %s13, 0
    loop: start=0, step=1, limit=4
    $region2: #{tpu_custom_call.1} parent=1 // loop_pre_header
      _
    $region3: #{tpu_custom_call.1} parent=1 // loop_header
      %s16 = sphi 0, %s20
      %p17 = scmp.ge.s32.totalorder %s16, 4
      %s26 = sphi 0, %s28
      %s29 = sphi 0, %s26
      %s30 = sphi 0, %s29
      %s46 = sphi 0, %s30
      %s50 = sphi 0, %s50
      %s52 = sphi 0, %s50
      %s53 = sphi 0, %s52
      %s67 = sphi 0, %s53
      %s71 = sphi 0, %s71
      %s73 = sphi 0, %s71
      %s74 = sphi 0, %s73
      %s88 = sphi 0, %s74
      %s94 = sphi 0, %s96
      %s97 = sphi 0, %s94
      %s98 = sphi 0, %s97
      %s114 = sphi 0, %s98
    $region4: #{tpu_custom_call.1} parent=1 // loop_header_branch
      %19 = sbr.rel (%p17) target = $region8
    $region5: #{tpu_custom_call.1} parent=1 // loop_body
      %s21 = ssub.s32 %s16, 1
      %s22 = ssub.s32 %s16, 2
      %s23 = sadd.s32 %s16, 1
      %s24 = ssub.s32 %s16, %s23
      %p25 = scmp.eq.s32.totalorder %s24, 0
      %s27 = sadd.s32 %s26, 1
      %s28 = scalar_select %p25, %s26, %s27
      %p31 = pneg %p25
      %p32 = scmp.eq.s32.totalorder %s16, 1
      %p33 = por %p31, %p32
      %p34 = scmp.ne.s32.totalorder %s26, %s29
      %p35 = scmp.eq.s32.totalorder %s16, 0
      %p36 = por %p34, %p35
      %p37 = scmp.ne.s32.totalorder %s26, %s29
      %p38 = scmp.eq.s32.totalorder %s21, 1
      %p39 = por %p37, %p38
      %p40 = scmp.ne.s32.totalorder %s29, %s30
      %p41 = scmp.eq.s32.totalorder %s21, 0
      %p42 = por %p40, %p41
      %p43 = scmp.ne.s32.totalorder %s29, %s30
      %p44 = scmp.eq.s32.totalorder %s22, 1
      %p45 = por %p43, %p44
      %p47 = scmp.ne.s32.totalorder %s30, %s46
      %p48 = scmp.eq.s32.totalorder %s22, 0
      %p49 = por %p47, %p48
      %s51 = sadd.s32 %s50, 1
      %p54 = scmp.eq.s32.totalorder %s16, 1
      %p55 = scmp.ne.s32.totalorder %s50, %s52
      %p56 = scmp.eq.s32.totalorder %s16, 0
      %p57 = por %p55, %p56
      %p58 = scmp.ne.s32.totalorder %s50, %s52
      %p59 = scmp.eq.s32.totalorder %s21, 1
      %p60 = por %p58, %p59
      %p61 = scmp.ne.s32.totalorder %s52, %s53
      %p62 = scmp.eq.s32.totalorder %s21, 0
      %p63 = por %p61, %p62
      %p64 = scmp.ne.s32.totalorder %s52, %s53
      %p65 = scmp.eq.s32.totalorder %s22, 1
      %p66 = por %p64, %p65
      %p68 = scmp.ne.s32.totalorder %s53, %s67
      %p69 = scmp.eq.s32.totalorder %s22, 0
      %p70 = por %p68, %p69
      %s72 = sadd.s32 %s71, 1
      %p75 = scmp.eq.s32.totalorder %s16, 1
      %p76 = scmp.ne.s32.totalorder %s71, %s73
      %p77 = scmp.eq.s32.totalorder %s16, 0
      %p78 = por %p76, %p77
      %p79 = scmp.ne.s32.totalorder %s71, %s73
      %p80 = scmp.eq.s32.totalorder %s21, 1
      %p81 = por %p79, %p80
      %p82 = scmp.ne.s32.totalorder %s73, %s74
      %p83 = scmp.eq.s32.totalorder %s21, 0
      %p84 = por %p82, %p83
      %p85 = scmp.ne.s32.totalorder %s73, %s74
      %p86 = scmp.eq.s32.totalorder %s22, 1
      %p87 = por %p85, %p86
      %p89 = scmp.ne.s32.totalorder %s74, %s88
      %p90 = scmp.eq.s32.totalorder %s22, 0
      %p91 = por %p89, %p90
      %s92 = ssub.s32 %s16, %s23
      %p93 = scmp.eq.s32.totalorder %s92, 0
      %s95 = sadd.s32 %s94, 1
      %s96 = scalar_select %p93, %s94, %s95
      %p99 = pneg %p93
      %p100 = scmp.eq.s32.totalorder %s16, 1
      %p101 = por %p99, %p100
      %p102 = scmp.ne.s32.totalorder %s94, %s97
      %p103 = scmp.eq.s32.totalorder %s16, 0
      %p104 = por %p102, %p103
      %p105 = scmp.ne.s32.totalorder %s94, %s97
      %p106 = scmp.eq.s32.totalorder %s21, 1
      %p107 = por %p105, %p106
      %p108 = scmp.ne.s32.totalorder %s97, %s98
      %p109 = scmp.eq.s32.totalorder %s21, 0
      %p110 = por %p108, %p109
      %p111 = scmp.ne.s32.totalorder %s97, %s98
      %p112 = scmp.eq.s32.totalorder %s22, 1
      %p113 = por %p111, %p112
      %p115 = scmp.ne.s32.totalorder %s98, %s114
      %p116 = scmp.eq.s32.totalorder %s22, 0
      %p117 = por %p115, %p116
      %p118 = scmp.le.s32.totalorder 1, %s16
      %p119 = scmp.lt.s32.totalorder %s16, 3
      %p120 = pnand %p118, %p119
      %p121 = pneg %p120
      // Predicated region
      $region9: #{tpu_custom_call.1} parent=5 // pred_check
        _
      $region10: #{tpu_custom_call.1} parent=5 // pred_check_branch
        %123 = sbr.rel (%p120) target = $region12
      $region11: #{tpu_custom_call.1} parent=5 // pred_region
        %s124 = ssub.s32 %s16, 1
        // Predicated region
        $region13: #{tpu_custom_call.1} parent=11 // pred_check
          %p125 = pneg %p63
        $region14: #{tpu_custom_call.1} parent=11 // pred_check_branch
          %127 = sbr.rel (%p125) target = $region16
        $region15: #{tpu_custom_call.1} parent=11 // pred_region
          %s129 = ssub.s32 512, 512
          %130 = vsyncadd [#allocation6], %s129
          %s131 = sshll.u32 [#allocation5], 4
          %s132 = int_to_ptr.vmem [resolvable:$true] %s131
          %137 = dma.hbm_to_vmem [thread:$0]  %s1, 512, %s132, [#allocation6], 128, 128, 8
        $region16: #{tpu_custom_call.1} parent=11 // pred_fallthru
          _
        // Predicated region
        $region17: #{tpu_custom_call.1} parent=11 // pred_check
          %p138 = pneg %p84
        $region18: #{tpu_custom_call.1} parent=11 // pred_check_branch
          %140 = sbr.rel (%p138) target = $region20
        $region19: #{tpu_custom_call.1} parent=11 // pred_region
          %s142 = ssub.s32 32, 32
          %143 = vsyncadd [#allocation6], %s142
          %s145 = sshll.u32 [#allocation7], 4
          %s146 = int_to_ptr.vmem [resolvable:$true] %s145
          %148 = dma.hbm_to_vmem [thread:$0]  %s2, 32, %s146, [#allocation6]
        $region20: #{tpu_custom_call.1} parent=11 // pred_fallthru
          _
      $region12: #{tpu_custom_call.1} parent=5 // pred_fallthru
        _
      %p149 = scmp.lt.s32.totalorder %s16, 2
      // Predicated region
      $region21: #{tpu_custom_call.1} parent=5 // pred_check
        %p150 = pneg %p149
      $region22: #{tpu_custom_call.1} parent=5 // pred_check_branch
        %152 = sbr.rel (%p150) target = $region24
      $region23: #{tpu_custom_call.1} parent=5 // pred_region
        // Predicated region
        $region25: #{tpu_custom_call.1} parent=23 // pred_check
          %p153 = pneg %p36
        $region26: #{tpu_custom_call.1} parent=23 // pred_check_branch
          %155 = sbr.rel (%p153) target = $region28
        $region27: #{tpu_custom_call.1} parent=23 // pred_region
          %s156 = sand.u32 %s26, 1
          %s157 = scalar_lea.sflag [#allocation3], %s156
          %s158 = sand.u32 %s26, 1
          %s159 = smul.addr %s158, 64
          %s160 = scalar_lea.vmem [#allocation2], %s159
          %s162 = ssub.s32 1024, 1024
          %163 = vsyncadd %s157, %s162
          %s164 = smul.addr %s16, 8
          %s165 = smul.addr %s164, 128
          %s166 = scalar_lea.hbm %s0, %s165
          %s167 = sshll.u32 %s160, 4
          %s168 = int_to_ptr.vmem [resolvable:$true] %s167
          %173 = dma.hbm_to_vmem [thread:$0]  %s166, 1024, %s168, %s157, 256, 256, 16
        $region28: #{tpu_custom_call.1} parent=23 // pred_fallthru
          _
      $region24: #{tpu_custom_call.1} parent=5 // pred_fallthru
        _
      %p174 = scmp.le.s32.totalorder 1, %s16
      %p175 = scmp.lt.s32.totalorder %s16, 3
      %p176 = pnand %p174, %p175
      %p177 = pneg %p176
      // Predicated region
      $region29: #{tpu_custom_call.1} parent=5 // pred_check
        _
      $region30: #{tpu_custom_call.1} parent=5 // pred_check_branch
        %179 = sbr.rel (%p176) target = $region32
      $region31: #{tpu_custom_call.1} parent=5 // pred_region
        %s180 = ssub.s32 %s16, 1
        %s181 = sand.u32 %s29, 1
        %s182 = scalar_lea.sflag [#allocation3], %s181
        %s183 = sand.u32 %s29, 1
        %s184 = smul.addr %s183, 64
        %s185 = scalar_lea.vmem [#allocation2], %s184
        // Predicated region
        $region33: #{tpu_custom_call.1} parent=31 // pred_check
          %p186 = pneg %p42
        $region34: #{tpu_custom_call.1} parent=31 // pred_check_branch
          %188 = sbr.rel (%p186) target = $region36
        $region35: #{tpu_custom_call.1} parent=31 // pred_region
          %189 = dma.done %s182, 1024
        $region36: #{tpu_custom_call.1} parent=31 // pred_fallthru
          _
        // Predicated region
        $region37: #{tpu_custom_call.1} parent=31 // pred_check
          %p190 = pneg %p63
        $region38: #{tpu_custom_call.1} parent=31 // pred_check_branch
          %192 = sbr.rel (%p190) target = $region40
        $region39: #{tpu_custom_call.1} parent=31 // pred_region
          %193 = dma.done [#allocation6], 512
        $region40: #{tpu_custom_call.1} parent=31 // pred_fallthru
          _
        // Predicated region
        $region41: #{tpu_custom_call.1} parent=31 // pred_check
          %p194 = pneg %p84
        $region42: #{tpu_custom_call.1} parent=31 // pred_check_branch
          %196 = sbr.rel (%p194) target = $region44
        $region43: #{tpu_custom_call.1} parent=31 // pred_region
          %197 = dma.done [#allocation6], 32
        $region44: #{tpu_custom_call.1} parent=31 // pred_fallthru
          _
        %s198 = sand.u32 %s29, 1
        %s199 = scalar_lea.sflag [#allocation3], %s198
        %s200 = sand.u32 %s29, 1
        %s201 = smul.addr %s200, 64
        %s202 = scalar_lea.vmem [#allocation2], %s201
        %p203 = pneg %p42
        %p204 = pneg %p39
        %p205 = pneg %p63
        %p206 = pneg %p60
        %p207 = pneg %p84
        %p208 = pneg %p81
        %p209 = pneg %p110
        %p210 = pneg %p107
        %s211 = sand.u32 %s97, 1
        %s212 = scalar_lea.sflag [#allocation4], %s211
        %s213 = sand.u32 %s97, 1
        %s214 = smul.addr %s213, 64
        %s215 = scalar_lea.vmem [#allocation8], %s214
        %v216 = vld [vmem:[%s185] sm:$0xff]
        %v217 = vld [vmem:[%s185 + $0x8] sm:$0xff]
        %v218 = vld [vmem:[%s185 + $0x10] sm:$0xff]
        %v219 = vld [vmem:[%s185 + $0x18] sm:$0xff]
        %v220 = vld [vmem:[%s185 + $0x20] sm:$0xff]
        %v221 = vld [vmem:[%s185 + $0x28] sm:$0xff]
        %v222 = vld [vmem:[%s185 + $0x30] sm:$0xff]
        %v223 = vld [vmem:[%s185 + $0x38] sm:$0xff]
        %v224 = vadd.f32 %v216, %v217
        %225 = vadd.xlane.f32.xlu0 %v224
        %v226 = vpop.xlane.xlu0 %225
        %v227 = vadd.f32 %v218, %v219
        %228 = vadd.xlane.f32.xlu0 %v227
        %v229 = vpop.xlane.xlu0 %228
        %v230 = vadd.f32 %v220, %v221
        %231 = vadd.xlane.f32.xlu0 %v230
        %v232 = vpop.xlane.xlu0 %231
        %v233 = vadd.f32 %v222, %v223
        %234 = vadd.xlane.f32.xlu0 %v233
        %v235 = vpop.xlane.xlu0 %234
        %v236 = vrcp.pop 256.0
        %v237 = vmul.f32 %v226, %v236
        %v238 = vmul.f32 %v229, %v236
        %v239 = vmul.f32 %v232, %v236
        %v240 = vmul.f32 %v235, %v236
        %v241 = vld [vmem:[#allocation5] sm:$0xff]
        %v242 = vld [vmem:[#allocation5 + $0x8] sm:$0xff]
        %v243 = vld [vmem:[#allocation5 + $0x10] sm:$0xff]
        %v244 = vld [vmem:[#allocation5 + $0x18] sm:$0xff]
        %v249 = vlaneseq
        %v250 = vand.u32 %v249, 127
        %v251 = vlaneseq
        %v252 = vshrl.u32 %v251, 7
        %v253 = vsub.s32 %v250, %v252
        %v254 = vrot.slane %v237, %v253
        %v255 = vadd.s32 %v250, 4294967288
        %v256 = vlaneseq
        %v257 = vshrl.u32 %v256, 7
        %v258 = vsub.s32 %v255, %v257
        %v259 = vrot.slane %v238, %v258
        %vm260 = vcmask 130112
        %v261 = vsel %vm260, %v259, %v254
        %v262 = vadd.s32 %v250, 4294967280
        %v263 = vlaneseq
        %v264 = vshrl.u32 %v263, 7
        %v265 = vsub.s32 %v262, %v264
        %v266 = vrot.slane %v239, %v265
        %vm267 = vcmask 195712
        %v268 = vsel %vm267, %v266, %v261
        %v269 = vadd.s32 %v250, 4294967272
        %v270 = vlaneseq
        %v271 = vshrl.u32 %v270, 7
        %v272 = vsub.s32 %v269, %v271
        %v273 = vrot.slane %v240, %v272
        %vm274 = vcmask 261312
        %v275 = vsel %vm274, %v273, %v268
        %vm276 = vcmask 261120
        %v277 = vsel %vm276, %v275, 0
        %279 = vmatprep.subr.mxu0 0.0
        %280 = vmatpush1.msra.mxu0 %v241
        %281 = vmatprep.subr.mxu0 0.0
        %282 = vmatpush1.msra.mxu0 %v242
        %283 = vmatprep.subr.mxu0 0.0
        %284 = vmatpush1.msra.mxu0 %v243
        %285 = vmatprep.subr.mxu0 0.0
        %286 = vmatpush1.msra.mxu0 %v244
        %287 = vmatprep.subr.mxu0 0.0
        %288 = vmatpush1.msra.mxu0 0.0
        %289 = vmatprep.subr.mxu0 0.0
        %290 = vmatpush1.msra.mxu0 0.0
        %291 = vmatprep.subr.mxu0 0.0
        %292 = vmatpush1.msra.mxu0 0.0
        %293 = vmatprep.subr.mxu0 0.0
        %294 = vmatpush1.msra.mxu0 0.0
        %295 = vmatprep.subr.mxu0 0.0
        %296 = vmatpush1.msra.mxu0 0.0
        %297 = vmatprep.subr.mxu0 0.0
        %298 = vmatpush1.msra.mxu0 0.0
        %299 = vmatprep.subr.mxu0 0.0
        %300 = vmatpush1.msra.mxu0 0.0
        %301 = vmatprep.subr.mxu0 0.0
        %302 = vmatpush1.msra.mxu0 0.0
        %303 = vmatprep.subr.mxu0 0.0
        %304 = vmatpush1.msra.mxu0 0.0
        %305 = vmatprep.subr.mxu0 0.0
        %306 = vmatpush1.msra.mxu0 0.0
        %307 = vmatprep.subr.mxu0 0.0
        %308 = vmatpush1.msra.mxu0 0.0
        %309 = vmatprep.subr.mxu0 0.0
        %310 = vmatpush1.msra.mxu0 0.0
        %311 = vmatprep.subr.mxu0 0.0
        %312 = vmatpush1.msra.mxu0 0.0
        %313 = vmatprep.subr.mxu0 0.0
        %314 = vmatpush1.msra.mxu0 0.0
        %315 = vmatprep.subr.mxu0 0.0
        %316 = vmatpush1.msra.mxu0 0.0
        %317 = vmatprep.subr.mxu0 0.0
        %318 = vmatpush1.msra.mxu0 0.0
        %319 = vmatprep.subr.mxu0 0.0
        %320 = vmatpush1.msra.mxu0 0.0
        %321 = vmatprep.subr.mxu0 0.0
        %322 = vmatpush1.msra.mxu0 0.0
        %323 = vmatprep.subr.mxu0 0.0
        %324 = vmatpush1.msra.mxu0 0.0
        %325 = vmatprep.subr.mxu0 0.0
        %326 = vmatpush1.msra.mxu0 0.0
        %327 = vmatprep.subr.mxu0 0.0
        %328 = vmatpush1.msra.mxu0 0.0
        %329 = vmatprep.subr.mxu0 0.0
        %330 = vmatpush1.msra.mxu0 0.0
        %331 = vmatprep.subr.mxu0 0.0
        %332 = vmatpush1.msra.mxu0 0.0
        %333 = vmatprep.subr.mxu0 0.0
        %334 = vmatpush1.msra.mxu0 0.0
        %335 = vmatprep.subr.mxu0 0.0
        %336 = vmatpush1.msra.mxu0 0.0
        %337 = vmatprep.subr.mxu0 0.0
        %338 = vmatpush1.msra.mxu0 0.0
        %339 = vmatprep.subr.mxu0 0.0
        %340 = vmatpush1.msra.mxu0 0.0
        %341 = vmatprep.subr.mxu0 0.0
        %342 = vmatpush1.msra.mxu0 0.0
        %343 = vmatprep.mubr.f32.mxu0 0.0
        %344 = vmatmul.mubr.f32.gmra.mrb[0].mxu0 %v277
        %v345 = vpop.f32.mrb[0].mxu0
        %v346 = vadd.f32 0.0, %v345
        %v347 = vpop.f32.mrb[0].mxu0
        %348 = vdwg.mxu0
        %v349 = vmax.f32 %v346, 0.0
        %v350 = vld [vmem:[#allocation7] sm:$0x3]
        %vm351 = vcmask 15360
        %v353 = vsel %vm351, %v349, 0
        %vm355 = vcmask 1041408
        %v357 = vsel %vm355, %v350, 0
        %359 = vmatprep.subr.mxu0 0.0
        %360 = vmatpush1.msra.mxu0 %v357
        %361 = vmatprep.subr.mxu0 0.0
        %362 = vmatpush1.msra.mxu0 0.0
        %363 = vmatprep.subr.mxu0 0.0
        %364 = vmatpush1.msra.mxu0 0.0
        %365 = vmatprep.subr.mxu0 0.0
        %366 = vmatpush1.msra.mxu0 0.0
        %367 = vmatprep.subr.mxu0 0.0
        %368 = vmatpush1.msra.mxu0 0.0
        %369 = vmatprep.subr.mxu0 0.0
        %370 = vmatpush1.msra.mxu0 0.0
        %371 = vmatprep.subr.mxu0 0.0
        %372 = vmatpush1.msra.mxu0 0.0
        %373 = vmatprep.subr.mxu0 0.0
        %374 = vmatpush1.msra.mxu0 0.0
        %375 = vmatprep.subr.mxu0 0.0
        %376 = vmatpush1.msra.mxu0 0.0
        %377 = vmatprep.subr.mxu0 0.0
        %378 = vmatpush1.msra.mxu0 0.0
        %379 = vmatprep.subr.mxu0 0.0
        %380 = vmatpush1.msra.mxu0 0.0
        %381 = vmatprep.subr.mxu0 0.0
        %382 = vmatpush1.msra.mxu0 0.0
        %383 = vmatprep.subr.mxu0 0.0
        %384 = vmatpush1.msra.mxu0 0.0
        %385 = vmatprep.subr.mxu0 0.0
        %386 = vmatpush1.msra.mxu0 0.0
        %387 = vmatprep.subr.mxu0 0.0
        %388 = vmatpush1.msra.mxu0 0.0
        %389 = vmatprep.subr.mxu0 0.0
        %390 = vmatpush1.msra.mxu0 0.0
        %391 = vmatprep.subr.mxu0 0.0
        %392 = vmatpush1.msra.mxu0 0.0
        %393 = vmatprep.subr.mxu0 0.0
        %394 = vmatpush1.msra.mxu0 0.0
        %395 = vmatprep.subr.mxu0 0.0
        %396 = vmatpush1.msra.mxu0 0.0
        %397 = vmatprep.subr.mxu0 0.0
        %398 = vmatpush1.msra.mxu0 0.0
        %399 = vmatprep.subr.mxu0 0.0
        %400 = vmatpush1.msra.mxu0 0.0
        %401 = vmatprep.subr.mxu0 0.0
        %402 = vmatpush1.msra.mxu0 0.0
        %403 = vmatprep.subr.mxu0 0.0
        %404 = vmatpush1.msra.mxu0 0.0
        %405 = vmatprep.subr.mxu0 0.0
        %406 = vmatpush1.msra.mxu0 0.0
        %407 = vmatprep.subr.mxu0 0.0
        %408 = vmatpush1.msra.mxu0 0.0
        %409 = vmatprep.subr.mxu0 0.0
        %410 = vmatpush1.msra.mxu0 0.0
        %411 = vmatprep.subr.mxu0 0.0
        %412 = vmatpush1.msra.mxu0 0.0
        %413 = vmatprep.subr.mxu0 0.0
        %414 = vmatpush1.msra.mxu0 0.0
        %415 = vmatprep.subr.mxu0 0.0
        %416 = vmatpush1.msra.mxu0 0.0
        %417 = vmatprep.subr.mxu0 0.0
        %418 = vmatpush1.msra.mxu0 0.0
        %419 = vmatprep.subr.mxu0 0.0
        %420 = vmatpush1.msra.mxu0 0.0
        %421 = vmatprep.subr.mxu0 0.0
        %422 = vmatpush1.msra.mxu0 0.0
        %423 = vmatprep.mubr.f32.mxu0 0.0
        %424 = vmatmul.mubr.f32.gmra.mrb[0].mxu0 %v353
        %v425 = vpop.f32.mrb[0].mxu0
        %v426 = vadd.f32 0.0, %v425
        %v427 = vpop.f32.mrb[0].mxu0
        %428 = vdwg.mxu0
        %v429 = vxor.u32 %v426, 2147483648
        %v430 = vmul.f32 %v429, 1.442695
        %v431 = vpow.pop %v430
        %v432 = vadd.f32 %v431, 1.0
        %v433 = vrcp.pop %v432
        %v434 = vmul.f32 1.0, %v433
        %v435 = vlaneseq
        %v436 = vshrl.u32 %v435, 7
        %v437 = vsub.s32 0, %v436
        %v438 = vrot.slane %v434, %v437
        %440 = vbcast.lane.b32.xlu0 %v438, 256
        %v441 = vpop.permute.xlu0 %440
        %s443 = sor.u32 256, 8
        %444 = vbcast.lane.b32.xlu0 %v438, %s443
        %v445 = vpop.permute.xlu0 %444
        %s447 = sor.u32 256, 16
        %448 = vbcast.lane.b32.xlu0 %v438, %s447
        %v449 = vpop.permute.xlu0 %448
        %s451 = sor.u32 256, 24
        %452 = vbcast.lane.b32.xlu0 %v438, %s451
        %v453 = vpop.permute.xlu0 %452
        %v454 = vmul.f32 %v216, %v441
        %v455 = vmul.f32 %v217, %v441
        %v456 = vmul.f32 %v218, %v445
        %v457 = vmul.f32 %v219, %v445
        %v458 = vmul.f32 %v220, %v449
        %v459 = vmul.f32 %v221, %v449
        %v460 = vmul.f32 %v222, %v453
        %v461 = vmul.f32 %v223, %v453
        %462 = vst [vmem:[%s215] sm:$0xff] %v454
        %463 = vst [vmem:[%s215 + $0x8] sm:$0xff] %v455
        %464 = vst [vmem:[%s215 + $0x10] sm:$0xff] %v456
        %465 = vst [vmem:[%s215 + $0x18] sm:$0xff] %v457
        %466 = vst [vmem:[%s215 + $0x20] sm:$0xff] %v458
        %467 = vst [vmem:[%s215 + $0x28] sm:$0xff] %v459
        %468 = vst [vmem:[%s215 + $0x30] sm:$0xff] %v460
        %469 = vst [vmem:[%s215 + $0x38] sm:$0xff] %v461
        %s470 = sand.u32 %s97, 1
        %s471 = scalar_lea.sflag [#allocation4], %s470
        %s472 = sand.u32 %s97, 1
        %s473 = smul.addr %s472, 64
        %s474 = scalar_lea.vmem [#allocation8], %s473
        // Predicated region
        $region45: #{tpu_custom_call.1} parent=31 // pred_check
          %p475 = pneg %p107
        $region46: #{tpu_custom_call.1} parent=31 // pred_check_branch
          %477 = sbr.rel (%p475) target = $region48
        $region47: #{tpu_custom_call.1} parent=31 // pred_region
          %s479 = ssub.s32 1024, 1024
          %480 = vsyncadd %s471, %s479
          %s481 = smul.addr %s21, 8
          %s482 = smul.addr %s481, 128
          %s483 = scalar_lea.hbm %s3, %s482
          %s484 = sshll.u32 %s474, 4
          %s485 = int_to_ptr.vmem [resolvable:$true] %s484
          %490 = dma.vmem_to_hbm [thread:$0]  %s485, 1024, %s483, %s471, 256, 256, 16
        $region48: #{tpu_custom_call.1} parent=31 // pred_fallthru
          _
      $region32: #{tpu_custom_call.1} parent=5 // pred_fallthru
        _
      %p491 = scmp.le.s32.totalorder 2, %s16
      // Predicated region
      $region49: #{tpu_custom_call.1} parent=5 // pred_check
        %p492 = pneg %p491
      $region50: #{tpu_custom_call.1} parent=5 // pred_check_branch
        %494 = sbr.rel (%p492) target = $region52
      $region51: #{tpu_custom_call.1} parent=5 // pred_region
        %s495 = ssub.s32 %s16, 2
        // Predicated region
        $region53: #{tpu_custom_call.1} parent=51 // pred_check
          %p496 = pneg %p113
        $region54: #{tpu_custom_call.1} parent=51 // pred_check_branch
          %498 = sbr.rel (%p496) target = $region56
        $region55: #{tpu_custom_call.1} parent=51 // pred_region
          %s499 = sand.u32 %s98, 1
          %s500 = scalar_lea.sflag [#allocation4], %s499
          %s501 = sand.u32 %s98, 1
          %s502 = smul.addr %s501, 64
          %s503 = scalar_lea.vmem [#allocation8], %s502
          %504 = dma.done %s500, 1024
        $region56: #{tpu_custom_call.1} parent=51 // pred_fallthru
          _
      $region52: #{tpu_custom_call.1} parent=5 // pred_fallthru
        _
    $region6: #{tpu_custom_call.1} parent=1 // loop_footer
      %s20 = sadd.s32 1, %s16
    $region7: #{tpu_custom_call.1} parent=1 // loop_footer_branch
      %15 = sbr.rel target = $region3
    $region8: #{tpu_custom_call.1} parent=1 // loop_exit
      _
    %505 = vsyncpa [#allocation3], 1
    %s506 = scalar_lea.sflag [#allocation3], 1
    %507 = vsyncpa %s506, 1
    %508 = vsyncpa [#allocation6], 1
    %509 = vsyncpa [#allocation4], 1
    %s510 = scalar_lea.sflag [#allocation4], 1
    %511 = vsyncpa %s510, 1

</llo_original>
